<compile_context>
chip_gen: v7x
topology: tpu7x:2x2x1
jax: 0.10.0
libtpu: 0.0.40
codegen_flags: <defaults>
</compile_context>

<pallas_src>
import math
import functools

import jax
import jax.numpy as jnp
from jax import lax
from jax.experimental import pallas as pl
from jax.experimental.pallas import tpu as pltpu

_LANE_WIDTH = 512      # lane-dense last dim (multiple of 128)
_TILE_ROWS = 1024      # 1024 x 512 x 4 B = 2 MiB per f32 tile


def _u32_as_i32(v):
    # express an unsigned 32-bit constant as its two's-complement int32 value so
    # the whole hash runs in wrapping int32 arithmetic.
    v &= 0xFFFFFFFF
    return v - (1 << 32) if v >= (1 << 31) else v


_GOLDEN = _u32_as_i32(0x9E3779B9)    # Weyl increment (per-seed stream offset)
_MURMUR1 = _u32_as_i32(0x85EBCA6B)   # murmur3 fmix32 constants
_MURMUR2 = _u32_as_i32(0xC2B2AE35)


def _srl(v, n):
    # logical right shift on the int32 bit pattern
    return lax.shift_right_logical(v, jnp.int32(n))


def _gaussian_dropout_kernel(seed_ref, x_ref, o_ref, *, std):
    """One (tile_rows, width) tile: y = x * (z * std + 1), z ~ N(0, 1)."""
    br, bw = x_ref.shape

    # Global flat element index of every element in this tile (counter-based
    # PRNG => per-element independent noise, invariant to the tiling).
    base = pl.program_id(0) * jnp.int32(br * bw)
    row = lax.broadcasted_iota(jnp.int32, (br, bw), 0)
    col = lax.broadcasted_iota(jnp.int32, (br, bw), 1)
    idx = base + row * jnp.int32(bw) + col

    # Mix in the user seed, then murmur3 fmix32 avalanche (wrapping int32 math,
    # logical shifts => bit-identical to the uint32 reference hash).
    h = idx + seed_ref[0] * jnp.int32(_GOLDEN)
    h = h ^ _srl(h, 16)
    h = h * jnp.int32(_MURMUR1)
    h = h ^ _srl(h, 13)
    h = h * jnp.int32(_MURMUR2)
    h = h ^ _srl(h, 16)

    # Top 24 bits -> uniform strictly inside (0, 1).
    v = _srl(h, 8).astype(jnp.float32)
    u = v * jnp.float32(1.0 / (1 << 24)) + jnp.float32(1.0 / (1 << 25))
    # Standard normal via inverse CDF (same transform jax.random.normal uses).
    z = jnp.float32(math.sqrt(2.0)) * lax.erf_inv(
        jnp.float32(2.0) * u - jnp.float32(1.0))

    noise = z * jnp.float32(std) + jnp.float32(1.0)
    x = x_ref[...].astype(jnp.float32)   # f32 compute path (v5e-safe for bf16 in)
    o_ref[...] = (x * noise).astype(o_ref.dtype)


def gaussian_dropout(x, drop_rate, seed, training=True):
    """JAX/Pallas equivalent of GaussianDropout.forward."""
    if not training:
        return x

    std = math.sqrt(drop_rate / (1.0 - drop_rate))
    orig_shape = x.shape
    orig_dtype = x.dtype
    total = x.size

    # Flatten to a lane-dense (rows, 512) slab.  Pad only when the size is
    # ragged (typical NCHW activation sizes divide 512 => no extra HBM pass).
    width = _LANE_WIDTH
    rows = pl.cdiv(total, width)
    padded = rows * width
    xf = x.reshape(-1)
    if padded != total:
        xf = jnp.pad(xf, (0, padded - total))
    x2d = xf.reshape(rows, width)

    # Row-tiled 1-D grid; full-array block for small inputs.  Blocks obey the
    # (8, 128) rule (tile_rows multiple of 8 when tiled, or equal to rows).
    tile_rows = rows if rows <= _TILE_ROWS else _TILE_ROWS
    grid = (pl.cdiv(rows, tile_rows),)

    seed_arr = jnp.asarray([seed], dtype=jnp.int32)

    out2d = pl.pallas_call(
        functools.partial(_gaussian_dropout_kernel, std=std),
        out_shape=jax.ShapeDtypeStruct((rows, width), orig_dtype),
        grid=grid,
        in_specs=[
            pl.BlockSpec(memory_space=pltpu.MemorySpace.SMEM),   # seed scalar
            pl.BlockSpec((tile_rows, width), lambda i: (i, 0)),  # x tile
        ],
        out_specs=pl.BlockSpec((tile_rows, width), lambda i: (i, 0)),
        compiler_params=pltpu.CompilerParams(
            dimension_semantics=("parallel",),   # shard row tiles across TCs (v7x)
        ),
    )(seed_arr, x2d)

    out = out2d.reshape(-1)
    if padded != total:
        out = out[:total]
    return out.reshape(orig_shape)


if __name__ == "__main__":
    key = jax.random.PRNGKey(0)
    # NCHW input, small shapes: batch=2, channels=4, spatial=16x16
    x = jax.random.normal(key, (2, 4, 16, 16), dtype=jnp.float32)

    drop_rate = 0.3
    y_train = gaussian_dropout(x, drop_rate, seed=1234, training=True)
    y_eval = gaussian_dropout(x, drop_rate, seed=1234, training=False)

    jax.block_until_ready(y_train)
    jax.block_until_ready(y_eval)

    assert y_train.shape == x.shape and y_train.dtype == x.dtype
    # Eval mode is identity.
    assert bool(jnp.allclose(y_eval, x))
    # Training mode: finite, and actually perturbed.
    assert bool(jnp.all(jnp.isfinite(y_train)))
    assert not bool(jnp.allclose(y_train, x))

    # Sanity-check the multiplicative noise statistics: mean ~ 1.0,
    # std ~ sqrt(p/(1-p)) = 0.6547 (loose bounds; 2048 samples).
    ratio = y_train / jnp.where(jnp.abs(x) > 1e-3, x, 1.0)
    mask = jnp.abs(x) > 1e-3
    n = jnp.sum(mask).astype(jnp.float32)
    mean = jnp.sum(jnp.where(mask, ratio, 0.0)) / n
    var = jnp.sum(jnp.where(mask, (ratio - mean) ** 2, 0.0)) / n
    std_emp = float(jnp.sqrt(var))
    assert abs(float(mean) - 1.0) < 0.2, float(mean)
    assert 0.35 < std_emp < 1.0, std_emp

    print("KERNEL_OK")
</pallas_src>

<mosaic_0001>
module attributes {stable_mosaic.version = 11 : i64} {
  func.func @_gaussian_dropout_kernel(%arg0: i32, %arg1: memref<1xi32, #tpu.memory_space<smem>>, %arg2: memref<4x512xf32, #tpu.memory_space<vmem>>, %arg3: memref<4x512xf32, #tpu.memory_space<vmem>>) attributes {dimension_semantics = [#tpu.dimension_semantics<parallel>], iteration_bounds = array<i64: 1>, scalar_prefetch = 0 : i64, scratch_operands = 0 : i64, tpu.core_type = #tpu.core_type<tc>, window_params = [{transform_indices = @transform_0, window_bounds = array<i64: 1>}, {transform_indices = @transform_1, window_bounds = array<i64: 4, 512>}, {transform_indices = @transform_2, window_bounds = array<i64: 4, 512>}]} {
    %c2048_i32 = arith.constant 2048 : i32
    %0 = arith.muli %arg0, %c2048_i32 : i32
    %1 = tpu.iota {dimensions = array<i32: 0>} : vector<4x512xi32>
    %2 = tpu.iota {dimensions = array<i32: 1>} : vector<4x512xi32>
    %c512_i32 = arith.constant 512 : i32
    %3 = vector.broadcast %c512_i32 : i32 to vector<4x512xi32>
    %4 = arith.muli %1, %3 : vector<4x512xi32>
    %5 = vector.broadcast %0 : i32 to vector<4x512xi32>
    %6 = arith.addi %5, %4 : vector<4x512xi32>
    %7 = arith.addi %6, %2 : vector<4x512xi32>
    %c0 = arith.constant 0 : index
    %8 = memref.load %arg1[%c0] : memref<1xi32, #tpu.memory_space<smem>>
    %c-1640531527_i32 = arith.constant -1640531527 : i32
    %9 = arith.muli %8, %c-1640531527_i32 : i32
    %10 = vector.broadcast %9 : i32 to vector<4x512xi32>
    %11 = arith.addi %7, %10 : vector<4x512xi32>
    %c16_i32 = arith.constant 16 : i32
    %12 = vector.broadcast %c16_i32 : i32 to vector<4x512xi32>
    %13 = arith.shrui %11, %12 : vector<4x512xi32>
    %14 = arith.xori %11, %13 : vector<4x512xi32>
    %c-2048144789_i32 = arith.constant -2048144789 : i32
    %15 = vector.broadcast %c-2048144789_i32 : i32 to vector<4x512xi32>
    %16 = arith.muli %14, %15 : vector<4x512xi32>
    %c13_i32 = arith.constant 13 : i32
    %17 = vector.broadcast %c13_i32 : i32 to vector<4x512xi32>
    %18 = arith.shrui %16, %17 : vector<4x512xi32>
    %19 = arith.xori %16, %18 : vector<4x512xi32>
    %c-1028477387_i32 = arith.constant -1028477387 : i32
    %20 = vector.broadcast %c-1028477387_i32 : i32 to vector<4x512xi32>
    %21 = arith.muli %19, %20 : vector<4x512xi32>
    %c16_i32_0 = arith.constant 16 : i32
    %22 = vector.broadcast %c16_i32_0 : i32 to vector<4x512xi32>
    %23 = arith.shrui %21, %22 : vector<4x512xi32>
    %24 = arith.xori %21, %23 : vector<4x512xi32>
    %c8_i32 = arith.constant 8 : i32
    %25 = vector.broadcast %c8_i32 : i32 to vector<4x512xi32>
    %26 = arith.shrui %24, %25 : vector<4x512xi32>
    %27 = arith.sitofp %26 : vector<4x512xi32> to vector<4x512xf32>
    %cst = arith.constant 5.96046448E-8 : f32
    %28 = vector.broadcast %cst : f32 to vector<4x512xf32>
    %29 = arith.mulf %27, %28 : vector<4x512xf32>
    %cst_1 = arith.constant 2.98023224E-8 : f32
    %30 = vector.broadcast %cst_1 : f32 to vector<4x512xf32>
    %31 = arith.addf %29, %30 : vector<4x512xf32>
    %cst_2 = arith.constant 2.000000e+00 : f32
    %32 = vector.broadcast %cst_2 : f32 to vector<4x512xf32>
    %33 = arith.mulf %32, %31 : vector<4x512xf32>
    %cst_3 = arith.constant 1.000000e+00 : f32
    %34 = vector.broadcast %cst_3 : f32 to vector<4x512xf32>
    %35 = arith.subf %33, %34 : vector<4x512xf32>
    %cst_4 = arith.constant 0.000000e+00 : f32
    %36 = vector.broadcast %cst_4 : f32 to vector<4x512xf32>
    %37 = arith.subf %36, %35 : vector<4x512xf32>
    %38 = arith.mulf %35, %37 : vector<4x512xf32>
    %39 = math.log1p %38 : vector<4x512xf32>
    %cst_5 = arith.constant 0.000000e+00 : f32
    %40 = vector.broadcast %cst_5 : f32 to vector<4x512xf32>
    %41 = arith.subf %40, %39 : vector<4x512xf32>
    %cst_6 = arith.constant 5.000000e+00 : f32
    %42 = vector.broadcast %cst_6 : f32 to vector<4x512xf32>
    %43 = arith.cmpf olt, %41, %42 : vector<4x512xf32>
    %cst_7 = arith.constant 2.500000e+00 : f32
    %44 = vector.broadcast %cst_7 : f32 to vector<4x512xf32>
    %45 = arith.subf %41, %44 : vector<4x512xf32>
    %46 = math.sqrt %41 : vector<4x512xf32>
    %cst_8 = arith.constant 3.000000e+00 : f32
    %47 = vector.broadcast %cst_8 : f32 to vector<4x512xf32>
    %48 = arith.subf %46, %47 : vector<4x512xf32>
    %49 = arith.select %43, %45, %48 : vector<4x512xi1>, vector<4x512xf32>
    %cst_9 = arith.constant 2.81022636E-8 : f32
    %cst_10 = arith.constant -2.00214257E-4 : f32
    %50 = vector.broadcast %cst_9 : f32 to vector<4x512xf32>
    %51 = vector.broadcast %cst_10 : f32 to vector<4x512xf32>
    %52 = arith.select %43, %50, %51 : vector<4x512xi1>, vector<4x512xf32>
    %cst_11 = arith.constant 3.43273939E-7 : f32
    %cst_12 = arith.constant 1.00950558E-4 : f32
    %53 = vector.broadcast %cst_11 : f32 to vector<4x512xf32>
    %54 = vector.broadcast %cst_12 : f32 to vector<4x512xf32>
    %55 = arith.select %43, %53, %54 : vector<4x512xi1>, vector<4x512xf32>
    %56 = arith.mulf %52, %49 : vector<4x512xf32>
    %57 = arith.addf %55, %56 : vector<4x512xf32>
    %cst_13 = arith.constant -3.5233877E-6 : f32
    %cst_14 = arith.constant 0.00134934322 : f32
    %58 = vector.broadcast %cst_13 : f32 to vector<4x512xf32>
    %59 = vector.broadcast %cst_14 : f32 to vector<4x512xf32>
    %60 = arith.select %43, %58, %59 : vector<4x512xi1>, vector<4x512xf32>
    %61 = arith.mulf %57, %49 : vector<4x512xf32>
    %62 = arith.addf %60, %61 : vector<4x512xf32>
    %cst_15 = arith.constant -4.39150654E-6 : f32
    %cst_16 = arith.constant -0.00367342844 : f32
    %63 = vector.broadcast %cst_15 : f32 to vector<4x512xf32>
    %64 = vector.broadcast %cst_16 : f32 to vector<4x512xf32>
    %65 = arith.select %43, %63, %64 : vector<4x512xi1>, vector<4x512xf32>
    %66 = arith.mulf %62, %49 : vector<4x512xf32>
    %67 = arith.addf %65, %66 : vector<4x512xf32>
    %cst_17 = arith.constant 2.1858087E-4 : f32
    %cst_18 = arith.constant 0.00573950773 : f32
    %68 = vector.broadcast %cst_17 : f32 to vector<4x512xf32>
    %69 = vector.broadcast %cst_18 : f32 to vector<4x512xf32>
    %70 = arith.select %43, %68, %69 : vector<4x512xi1>, vector<4x512xf32>
    %71 = arith.mulf %67, %49 : vector<4x512xf32>
    %72 = arith.addf %70, %71 : vector<4x512xf32>
    %cst_19 = arith.constant -0.00125372503 : f32
    %cst_20 = arith.constant -0.0076224613 : f32
    %73 = vector.broadcast %cst_19 : f32 to vector<4x512xf32>
    %74 = vector.broadcast %cst_20 : f32 to vector<4x512xf32>
    %75 = arith.select %43, %73, %74 : vector<4x512xi1>, vector<4x512xf32>
    %76 = arith.mulf %72, %49 : vector<4x512xf32>
    %77 = arith.addf %75, %76 : vector<4x512xf32>
    %cst_21 = arith.constant -0.00417768164 : f32
    %cst_22 = arith.constant 0.00943887047 : f32
    %78 = vector.broadcast %cst_21 : f32 to vector<4x512xf32>
    %79 = vector.broadcast %cst_22 : f32 to vector<4x512xf32>
    %80 = arith.select %43, %78, %79 : vector<4x512xi1>, vector<4x512xf32>
    %81 = arith.mulf %77, %49 : vector<4x512xf32>
    %82 = arith.addf %80, %81 : vector<4x512xf32>
    %cst_23 = arith.constant 0.246640727 : f32
    %cst_24 = arith.constant 1.00167406 : f32
    %83 = vector.broadcast %cst_23 : f32 to vector<4x512xf32>
    %84 = vector.broadcast %cst_24 : f32 to vector<4x512xf32>
    %85 = arith.select %43, %83, %84 : vector<4x512xi1>, vector<4x512xf32>
    %86 = arith.mulf %82, %49 : vector<4x512xf32>
    %87 = arith.addf %85, %86 : vector<4x512xf32>
    %cst_25 = arith.constant 1.50140941 : f32
    %cst_26 = arith.constant 2.83297682 : f32
    %88 = vector.broadcast %cst_25 : f32 to vector<4x512xf32>
    %89 = vector.broadcast %cst_26 : f32 to vector<4x512xf32>
    %90 = arith.select %43, %88, %89 : vector<4x512xi1>, vector<4x512xf32>
    %91 = arith.mulf %87, %49 : vector<4x512xf32>
    %92 = arith.addf %90, %91 : vector<4x512xf32>
    %93 = math.absf %35 : vector<4x512xf32>
    %cst_27 = arith.constant 1.000000e+00 : f32
    %94 = vector.broadcast %cst_27 : f32 to vector<4x512xf32>
    %95 = arith.cmpf oeq, %93, %94 : vector<4x512xf32>
    %cst_28 = arith.constant 0x7F800000 : f32
    %96 = vector.broadcast %cst_28 : f32 to vector<4x512xf32>
    %97 = arith.mulf %96, %35 : vector<4x512xf32>
    %98 = arith.mulf %92, %35 : vector<4x512xf32>
    %99 = arith.select %95, %97, %98 : vector<4x512xi1>, vector<4x512xf32>
    %cst_29 = arith.constant 1.41421354 : f32
    %100 = vector.broadcast %cst_29 : f32 to vector<4x512xf32>
    %101 = arith.mulf %100, %99 : vector<4x512xf32>
    %cst_30 = arith.constant 0.654653668 : f32
    %102 = vector.broadcast %cst_30 : f32 to vector<4x512xf32>
    %103 = arith.mulf %101, %102 : vector<4x512xf32>
    %cst_31 = arith.constant 1.000000e+00 : f32
    %104 = vector.broadcast %cst_31 : f32 to vector<4x512xf32>
    %105 = arith.addf %103, %104 : vector<4x512xf32>
    %c0_32 = arith.constant 0 : index
    %c0_33 = arith.constant 0 : index
    %106 = vector.load %arg2[%c0_32, %c0_33] : memref<4x512xf32, #tpu.memory_space<vmem>>, vector<4x512xf32>
    %107 = arith.mulf %106, %105 : vector<4x512xf32>
    %c0_34 = arith.constant 0 : index
    %c0_35 = arith.constant 0 : index
    %108 = vector.load %arg3[%c0_34, %c0_35] : memref<4x512xf32, #tpu.memory_space<vmem>>, vector<4x512xf32>
    tpu.vector_store %arg3[%c0_34, %c0_35], %107 {strides = array<i32>} : memref<4x512xf32, #tpu.memory_space<vmem>>, vector<4x512xf32>,
    return
  }
  func.func @transform_0(%arg0: i32) -> i32 {
    %c0_i32 = arith.constant 0 : i32
    %c0_i32_0 = arith.constant 0 : i32
    return %c0_i32 : i32
  }
  func.func @transform_1(%arg0: i32) -> (i32, i32) {
    %c0_i32 = arith.constant 0 : i32
    %c0_i32_0 = arith.constant 0 : i32
    return %arg0, %c0_i32 : i32, i32
  }
  func.func @transform_2(%arg0: i32) -> (i32, i32) {
    %c0_i32 = arith.constant 0 : i32
    %c0_i32_0 = arith.constant 0 : i32
    return %arg0, %c0_i32 : i32, i32
  }
}

</mosaic_0001>

<llo_original>
// kernel: tpu_custom_call.1
$region0: #{tpu_custom_call.1}
  #allocation0 [shape = 'u32[]', space=smem, size = 0x4, offset = 0x4, fixed_abs, tag = 'smem constant byte address 0x4 - core index']
  #allocation1 [shape = 'u32[144,128]{1,0:T(1,128)}', space=vmem, size = 0x12000, scoped, tag = 'internal scratch']
  #allocation2 [shape = 's32[1]{0:T(128)S(6)}', space=smem, size = 0x200, scoped, tag = 'scoped memory for tpu_custom_call.1']
  %s0 = inlined_call_operand.<no memory space> [shape: s32[1], index: 0, kind: input, shape index: {}]
  %s1 = inlined_call_operand.hbm [shape: f32[4,512], index: 1, kind: input, shape index: {}]
  %s2 = inlined_call_operand.hbm [shape: f32[4,512], index: 2, kind: output, shape index: {}]
  %s3 = sld [smem:[#allocation0]]
  $region22: #{tpu_custom_call.1} parent=0
    _
  %s5 = ssub.s32 1, %s3
  %s6 = scalar_select 0, %s5, %s3
  %7 = sst [smem:[#allocation2]] %s0
  $region1: #{tpu_custom_call.1} parent=0
    #allocation3 [shape = 'u8[8192]{0}', space=vmem, size = 0x2000, scoped, tag = 'input window, operand 1, single buffered']
    #allocation4 [shape = 's32[1]{0}', space=sflag, size = 0x4, scoped, tag = 'scoped memory for tpu_custom_call.1']
    #allocation5 [shape = 's32[1]{0}', space=sflag, size = 0x4, scoped, tag = 'scoped memory for tpu_custom_call.1']
    #allocation6 [shape = 'u8[8192]{0}', space=vmem, size = 0x2000, scoped, tag = 'output window, operand 0, single buffered']
    %8 = vsyncpa [#allocation4], 0
    %9 = vsyncpa [#allocation5], 0
    // Predicated region
    $region2: #{tpu_custom_call.1} parent=1 // pred_check
      _
    $region3: #{tpu_custom_call.1} parent=1 // pred_check_branch
      %11 = sbr.rel (0) target = $region5
    $region4: #{tpu_custom_call.1} parent=1 // pred_region
      _
    $region5: #{tpu_custom_call.1} parent=1 // pred_fallthru
      _
    // Predicated region
    $region6: #{tpu_custom_call.1} parent=1 // pred_check
      _
    $region7: #{tpu_custom_call.1} parent=1 // pred_check_branch
      %13 = sbr.rel (0) target = $region9
    $region8: #{tpu_custom_call.1} parent=1 // pred_region
      %s15 = ssub.s32 256, 256
      %16 = vsyncadd [#allocation4], %s15
      %s18 = sshll.u32 [#allocation3], 4
      %s19 = int_to_ptr.vmem [resolvable:$true] %s18
      %21 = dma.hbm_to_vmem [thread:$0]  %s1, 256, %s19, [#allocation4]
    $region9: #{tpu_custom_call.1} parent=1 // pred_fallthru
      _
    // Predicated region
    $region10: #{tpu_custom_call.1} parent=1 // pred_check
      _
    $region11: #{tpu_custom_call.1} parent=1 // pred_check_branch
      %23 = sbr.rel (0) target = $region13
    $region12: #{tpu_custom_call.1} parent=1 // pred_region
      %24 = dma.done [#allocation4], 256
    $region13: #{tpu_custom_call.1} parent=1 // pred_fallthru
      _
    %s25 = smul.u32 0, 2048
    %v26 = vlaneseq
    %v27 = vshrl.u32 %v26, 7
    %v28 = vlaneseq
    %v29 = vand.u32 %v28, 127
    %v30 = vadd.s32 %v29, 128
    %v31 = vadd.s32 %v29, 256
    %v32 = vadd.s32 %v29, 384
    %v33 = vmul.u32 %v27, 512
    %v34 = vstv %s25
    %v35 = vadd.s32 %v34, %v33
    %v36 = vadd.s32 %v35, %v29
    %v37 = vadd.s32 %v35, %v30
    %v38 = vadd.s32 %v35, %v31
    %v39 = vadd.s32 %v35, %v32
    %s40 = sld [smem:[#allocation2]]
    %s41 = smul.u32 %s40, 2654435769
    %v42 = vstv %s41
    %v43 = vadd.s32 %v36, %v42
    %v44 = vadd.s32 %v37, %v42
    %v45 = vadd.s32 %v38, %v42
    %v46 = vadd.s32 %v39, %v42
    %v47 = vshrl.u32 %v43, 16
    %v48 = vshrl.u32 %v44, 16
    %v49 = vshrl.u32 %v45, 16
    %v50 = vshrl.u32 %v46, 16
    %v51 = vxor.u32 %v43, %v47
    %v52 = vxor.u32 %v44, %v48
    %v53 = vxor.u32 %v45, %v49
    %v54 = vxor.u32 %v46, %v50
    %v55 = vmul.u32 %v51, 2246822507
    %v56 = vmul.u32 %v52, 2246822507
    %v57 = vmul.u32 %v53, 2246822507
    %v58 = vmul.u32 %v54, 2246822507
    %v59 = vshrl.u32 %v55, 13
    %v60 = vshrl.u32 %v56, 13
    %v61 = vshrl.u32 %v57, 13
    %v62 = vshrl.u32 %v58, 13
    %v63 = vxor.u32 %v55, %v59
    %v64 = vxor.u32 %v56, %v60
    %v65 = vxor.u32 %v57, %v61
    %v66 = vxor.u32 %v58, %v62
    %v67 = vmul.u32 %v63, 3266489909
    %v68 = vmul.u32 %v64, 3266489909
    %v69 = vmul.u32 %v65, 3266489909
    %v70 = vmul.u32 %v66, 3266489909
    %v71 = vshrl.u32 %v67, 16
    %v72 = vshrl.u32 %v68, 16
    %v73 = vshrl.u32 %v69, 16
    %v74 = vshrl.u32 %v70, 16
    %v75 = vxor.u32 %v67, %v71
    %v76 = vxor.u32 %v68, %v72
    %v77 = vxor.u32 %v69, %v73
    %v78 = vxor.u32 %v70, %v74
    %v79 = vshrl.u32 %v75, 8
    %v80 = vshrl.u32 %v76, 8
    %v81 = vshrl.u32 %v77, 8
    %v82 = vshrl.u32 %v78, 8
    %v83 = vcvt.s32.f32 %v79
    %v84 = vcvt.s32.f32 %v80
    %v85 = vcvt.s32.f32 %v81
    %v86 = vcvt.s32.f32 %v82
    %v87 = vmul.f32 %v83, 5.9604645e-08
    %v88 = vmul.f32 %v84, 5.9604645e-08
    %v89 = vmul.f32 %v85, 5.9604645e-08
    %v90 = vmul.f32 %v86, 5.9604645e-08
    %v91 = vadd.f32 %v87, 2.9802322e-08
    %v92 = vadd.f32 %v88, 2.9802322e-08
    %v93 = vadd.f32 %v89, 2.9802322e-08
    %v94 = vadd.f32 %v90, 2.9802322e-08
    %v95 = vmul.f32 %v91, 2.0
    %v96 = vmul.f32 %v92, 2.0
    %v97 = vmul.f32 %v93, 2.0
    %v98 = vmul.f32 %v94, 2.0
    %v99 = vsub.f32 %v95, 1.0
    %v100 = vsub.f32 %v96, 1.0
    %v101 = vsub.f32 %v97, 1.0
    %v102 = vsub.f32 %v98, 1.0
    %v103 = vsub.f32 0.0, %v99
    %v104 = vsub.f32 0.0, %v100
    %v105 = vsub.f32 0.0, %v101
    %v106 = vsub.f32 0.0, %v102
    %v107 = vmul.f32 %v99, %v103
    %v108 = vmul.f32 %v100, %v104
    %v109 = vmul.f32 %v101, %v105
    %v110 = vmul.f32 %v102, %v106
    %v111 = vadd.f32 %v107, 1.0
    %v112 = vlog2.pop %v111
    %v113 = vmul.f32 %v112, 0.6931472
    %v114 = vmul.f32 -0.5, %v107
    %v115 = vadd.f32 %v114, 1.0
    %v116 = vmul.f32 %v115, %v107
    %v117 = vand.u32 2147483647, %v107
    %vm118 = vcmp.lt.f32.partialorder %v117, 0.0004427343
    %v119 = vsel %vm118, %v116, %v113
    %v120 = vadd.f32 %v108, 1.0
    %v121 = vlog2.pop %v120
    %v122 = vmul.f32 %v121, 0.6931472
    %v123 = vmul.f32 -0.5, %v108
    %v124 = vadd.f32 %v123, 1.0
    %v125 = vmul.f32 %v124, %v108
    %v126 = vand.u32 2147483647, %v108
    %vm127 = vcmp.lt.f32.partialorder %v126, 0.0004427343
    %v128 = vsel %vm127, %v125, %v122
    %v129 = vadd.f32 %v109, 1.0
    %v130 = vlog2.pop %v129
    %v131 = vmul.f32 %v130, 0.6931472
    %v132 = vmul.f32 -0.5, %v109
    %v133 = vadd.f32 %v132, 1.0
    %v134 = vmul.f32 %v133, %v109
    %v135 = vand.u32 2147483647, %v109
    %vm136 = vcmp.lt.f32.partialorder %v135, 0.0004427343
    %v137 = vsel %vm136, %v134, %v131
    %v138 = vadd.f32 %v110, 1.0
    %v139 = vlog2.pop %v138
    %v140 = vmul.f32 %v139, 0.6931472
    %v141 = vmul.f32 -0.5, %v110
    %v142 = vadd.f32 %v141, 1.0
    %v143 = vmul.f32 %v142, %v110
    %v144 = vand.u32 2147483647, %v110
    %vm145 = vcmp.lt.f32.partialorder %v144, 0.0004427343
    %v146 = vsel %vm145, %v143, %v140
    %v147 = vsub.f32 0.0, %v119
    %v148 = vsub.f32 0.0, %v128
    %v149 = vsub.f32 0.0, %v137
    %v150 = vsub.f32 0.0, %v146
    %vm151 = vcmp.lt.f32.partialorder %v147, 5.0
    %vm152 = vcmp.lt.f32.partialorder %v148, 5.0
    %vm153 = vcmp.lt.f32.partialorder %v149, 5.0
    %vm154 = vcmp.lt.f32.partialorder %v150, 5.0
    %v155 = vsub.f32 %v147, 2.5
    %v156 = vsub.f32 %v148, 2.5
    %v157 = vsub.f32 %v149, 2.5
    %v158 = vsub.f32 %v150, 2.5
    %v159 = vrsqrt.pop %v147
    %v160 = vmul.f32 %v147, %v159
    %vm161 = vcmp.eq.f32.partialorder %v147, inf
    %v162 = vsel %vm161, %v147, %v160
    %vm163 = vcmp.eq.f32.partialorder %v147, 0.0
    %v164 = vand.u32 %v147, 2147483648
    %v165 = vsel %vm163, %v164, %v162
    %v166 = vrsqrt.pop %v148
    %v167 = vmul.f32 %v148, %v166
    %vm168 = vcmp.eq.f32.partialorder %v148, inf
    %v169 = vsel %vm168, %v148, %v167
    %vm170 = vcmp.eq.f32.partialorder %v148, 0.0
    %v171 = vand.u32 %v148, 2147483648
    %v172 = vsel %vm170, %v171, %v169
    %v173 = vrsqrt.pop %v149
    %v174 = vmul.f32 %v149, %v173
    %vm175 = vcmp.eq.f32.partialorder %v149, inf
    %v176 = vsel %vm175, %v149, %v174
    %vm177 = vcmp.eq.f32.partialorder %v149, 0.0
    %v178 = vand.u32 %v149, 2147483648
    %v179 = vsel %vm177, %v178, %v176
    %v180 = vrsqrt.pop %v150
    %v181 = vmul.f32 %v150, %v180
    %vm182 = vcmp.eq.f32.partialorder %v150, inf
    %v183 = vsel %vm182, %v150, %v181
    %vm184 = vcmp.eq.f32.partialorder %v150, 0.0
    %v185 = vand.u32 %v150, 2147483648
    %v186 = vsel %vm184, %v185, %v183
    %v187 = vsub.f32 %v165, 3.0
    %v188 = vsub.f32 %v172, 3.0
    %v189 = vsub.f32 %v179, 3.0
    %v190 = vsub.f32 %v186, 3.0
    %v191 = vsel %vm151, %v155, %v187
    %v192 = vsel %vm152, %v156, %v188
    %v193 = vsel %vm153, %v157, %v189
    %v194 = vsel %vm154, %v158, %v190
    %v195 = vsel %vm151, 2.8102264e-08, -0.00020021426
    %v196 = vsel %vm152, 2.8102264e-08, -0.00020021426
    %v197 = vsel %vm153, 2.8102264e-08, -0.00020021426
    %v198 = vsel %vm154, 2.8102264e-08, -0.00020021426
    %v199 = vsel %vm151, 3.4327394e-07, 0.00010095056
    %v200 = vsel %vm152, 3.4327394e-07, 0.00010095056
    %v201 = vsel %vm153, 3.4327394e-07, 0.00010095056
    %v202 = vsel %vm154, 3.4327394e-07, 0.00010095056
    %v203 = vmul.f32 %v195, %v191
    %v204 = vmul.f32 %v196, %v192
    %v205 = vmul.f32 %v197, %v193
    %v206 = vmul.f32 %v198, %v194
    %v207 = vadd.f32 %v199, %v203
    %v208 = vadd.f32 %v200, %v204
    %v209 = vadd.f32 %v201, %v205
    %v210 = vadd.f32 %v202, %v206
    %v211 = vsel %vm151, -3.5233877e-06, 0.0013493432
    %v212 = vsel %vm152, -3.5233877e-06, 0.0013493432
    %v213 = vsel %vm153, -3.5233877e-06, 0.0013493432
    %v214 = vsel %vm154, -3.5233877e-06, 0.0013493432
    %v215 = vmul.f32 %v207, %v191
    %v216 = vmul.f32 %v208, %v192
    %v217 = vmul.f32 %v209, %v193
    %v218 = vmul.f32 %v210, %v194
    %v219 = vadd.f32 %v211, %v215
    %v220 = vadd.f32 %v212, %v216
    %v221 = vadd.f32 %v213, %v217
    %v222 = vadd.f32 %v214, %v218
    %v223 = vsel %vm151, -4.3915065e-06, -0.0036734284
    %v224 = vsel %vm152, -4.3915065e-06, -0.0036734284
    %v225 = vsel %vm153, -4.3915065e-06, -0.0036734284
    %v226 = vsel %vm154, -4.3915065e-06, -0.0036734284
    %v227 = vmul.f32 %v219, %v191
    %v228 = vmul.f32 %v220, %v192
    %v229 = vmul.f32 %v221, %v193
    %v230 = vmul.f32 %v222, %v194
    %v231 = vadd.f32 %v223, %v227
    %v232 = vadd.f32 %v224, %v228
    %v233 = vadd.f32 %v225, %v229
    %v234 = vadd.f32 %v226, %v230
    %v235 = vsel %vm151, 0.00021858087, 0.0057395077
    %v236 = vsel %vm152, 0.00021858087, 0.0057395077
    %v237 = vsel %vm153, 0.00021858087, 0.0057395077
    %v238 = vsel %vm154, 0.00021858087, 0.0057395077
    %v239 = vmul.f32 %v231, %v191
    %v240 = vmul.f32 %v232, %v192
    %v241 = vmul.f32 %v233, %v193
    %v242 = vmul.f32 %v234, %v194
    %v243 = vadd.f32 %v235, %v239
    %v244 = vadd.f32 %v236, %v240
    %v245 = vadd.f32 %v237, %v241
    %v246 = vadd.f32 %v238, %v242
    %v247 = vsel %vm151, -0.001253725, -0.0076224613
    %v248 = vsel %vm152, -0.001253725, -0.0076224613
    %v249 = vsel %vm153, -0.001253725, -0.0076224613
    %v250 = vsel %vm154, -0.001253725, -0.0076224613
    %v251 = vmul.f32 %v243, %v191
    %v252 = vmul.f32 %v244, %v192
    %v253 = vmul.f32 %v245, %v193
    %v254 = vmul.f32 %v246, %v194
    %v255 = vadd.f32 %v247, %v251
    %v256 = vadd.f32 %v248, %v252
    %v257 = vadd.f32 %v249, %v253
    %v258 = vadd.f32 %v250, %v254
    %v259 = vsel %vm151, -0.0041776816, 0.0094388705
    %v260 = vsel %vm152, -0.0041776816, 0.0094388705
    %v261 = vsel %vm153, -0.0041776816, 0.0094388705
    %v262 = vsel %vm154, -0.0041776816, 0.0094388705
    %v263 = vmul.f32 %v255, %v191
    %v264 = vmul.f32 %v256, %v192
    %v265 = vmul.f32 %v257, %v193
    %v266 = vmul.f32 %v258, %v194
    %v267 = vadd.f32 %v259, %v263
    %v268 = vadd.f32 %v260, %v264
    %v269 = vadd.f32 %v261, %v265
    %v270 = vadd.f32 %v262, %v266
    %v271 = vsel %vm151, 0.24664073, 1.001674
    %v272 = vsel %vm152, 0.24664073, 1.001674
    %v273 = vsel %vm153, 0.24664073, 1.001674
    %v274 = vsel %vm154, 0.24664073, 1.001674
    %v275 = vmul.f32 %v267, %v191
    %v276 = vmul.f32 %v268, %v192
    %v277 = vmul.f32 %v269, %v193
    %v278 = vmul.f32 %v270, %v194
    %v279 = vadd.f32 %v271, %v275
    %v280 = vadd.f32 %v272, %v276
    %v281 = vadd.f32 %v273, %v277
    %v282 = vadd.f32 %v274, %v278
    %v283 = vsel %vm151, 1.5014094, 2.8329768
    %v284 = vsel %vm152, 1.5014094, 2.8329768
    %v285 = vsel %vm153, 1.5014094, 2.8329768
    %v286 = vsel %vm154, 1.5014094, 2.8329768
    %v287 = vmul.f32 %v279, %v191
    %v288 = vmul.f32 %v280, %v192
    %v289 = vmul.f32 %v281, %v193
    %v290 = vmul.f32 %v282, %v194
    %v291 = vadd.f32 %v283, %v287
    %v292 = vadd.f32 %v284, %v288
    %v293 = vadd.f32 %v285, %v289
    %v294 = vadd.f32 %v286, %v290
    %v295 = vand.u32 2147483647, %v99
    %v296 = vand.u32 2147483647, %v100
    %v297 = vand.u32 2147483647, %v101
    %v298 = vand.u32 2147483647, %v102
    %vm299 = vcmp.eq.f32.partialorder %v295, 1.0
    %vm300 = vcmp.eq.f32.partialorder %v296, 1.0
    %vm301 = vcmp.eq.f32.partialorder %v297, 1.0
    %vm302 = vcmp.eq.f32.partialorder %v298, 1.0
    %v303 = vmul.f32 %v99, inf
    %v304 = vmul.f32 %v100, inf
    %v305 = vmul.f32 %v101, inf
    %v306 = vmul.f32 %v102, inf
    %v307 = vmul.f32 %v291, %v99
    %v308 = vmul.f32 %v292, %v100
    %v309 = vmul.f32 %v293, %v101
    %v310 = vmul.f32 %v294, %v102
    %v311 = vsel %vm299, %v303, %v307
    %v312 = vsel %vm300, %v304, %v308
    %v313 = vsel %vm301, %v305, %v309
    %v314 = vsel %vm302, %v306, %v310
    %v315 = vmul.f32 %v311, 1.4142135
    %v316 = vmul.f32 %v312, 1.4142135
    %v317 = vmul.f32 %v313, 1.4142135
    %v318 = vmul.f32 %v314, 1.4142135
    %v319 = vmul.f32 %v315, 0.65465367
    %v320 = vmul.f32 %v316, 0.65465367
    %v321 = vmul.f32 %v317, 0.65465367
    %v322 = vmul.f32 %v318, 0.65465367
    %v323 = vadd.f32 %v319, 1.0
    %v324 = vadd.f32 %v320, 1.0
    %v325 = vadd.f32 %v321, 1.0
    %v326 = vadd.f32 %v322, 1.0
    %v327 = vld [vmem:[#allocation3] sm:$0xff]
    %v328 = vld [vmem:[#allocation3 + $0x8] sm:$0xff]
    %v333 = vcombine.low %v323, %v324
    %v334 = vcombine.low %v325, %v326
    %v337 = vmul.f32 %v327, %v333
    %v338 = vmul.f32 %v328, %v334
    %339 = vst [vmem:[#allocation6] sm:$0xff] %v337
    %340 = vst [vmem:[#allocation6 + $0x8] sm:$0xff] %v338
    // Predicated region
    $region14: #{tpu_custom_call.1} parent=1 // pred_check
      _
    $region15: #{tpu_custom_call.1} parent=1 // pred_check_branch
      %342 = sbr.rel (0) target = $region17
    $region16: #{tpu_custom_call.1} parent=1 // pred_region
      %s344 = ssub.s32 256, 256
      %345 = vsyncadd [#allocation5], %s344
      %s347 = sshll.u32 [#allocation6], 4
      %s348 = int_to_ptr.vmem [resolvable:$true] %s347
      %350 = dma.vmem_to_hbm [thread:$0]  %s348, 256, %s2, [#allocation5]
    $region17: #{tpu_custom_call.1} parent=1 // pred_fallthru
      _
    // Predicated region
    $region18: #{tpu_custom_call.1} parent=1 // pred_check
      _
    $region19: #{tpu_custom_call.1} parent=1 // pred_check_branch
      %352 = sbr.rel (0) target = $region21
    $region20: #{tpu_custom_call.1} parent=1 // pred_region
      %353 = dma.done [#allocation5], 256
    $region21: #{tpu_custom_call.1} parent=1 // pred_fallthru
      _
    %354 = vsyncpa [#allocation4], 1
    %355 = vsyncpa [#allocation5], 1

</llo_original>
